<compile_context>
chip_gen: v5e
topology: v5e:2x2
jax: 0.10.0
libtpu: 0.0.40
codegen_flags: <defaults>
</compile_context>

<pallas_src>
import functools

import numpy as np
import jax
import jax.numpy as jnp
from jax import lax
from jax.experimental import pallas as pl
from jax.experimental.pallas import tpu as pltpu

DEFAULT_WEIGHT = ((0.0, 0.25, 0.0),
                  (0.25, 0.0, 0.25),
                  (0.0, 0.25, 0.0))


def _stencil_kernel(u_ref, f_ref, o_ref, *, weight, cof, dv, ghost, nv_is_zero):
    """Fused boundary construction + channel-summed 3x3 stencil + RHS add.

    u_ref / f_ref / o_ref: (c, x, y) blocks (one batch image per grid step).
    The (1, c, 3, 3) conv2d weight is identical across channels, so the conv
    equals the 3x3 stencil applied to the channel-sum of the padded field and
    is broadcast back over channels.
    """
    u = u_ref[...].astype(jnp.float32)            # (c, x, y)
    f = f_ref[...].astype(jnp.float32)            # (c, x, y)
    c, x, y = u.shape

    # Channel sum (skip the reduction entirely for the in_channels=1 default).
    us = u[0] if c == 1 else jnp.sum(u, axis=0)   # (x, y)

    row = lax.broadcasted_iota(jnp.int32, (x, y), 0)
    col = lax.broadcasted_iota(jnp.int32, (x, y), 1)
    is_brow = (row == 0) | (row == x - 1)         # Dirichlet cap rows

    # Channel-summed padded field, interior columns (cap rows -> c*dv).
    vs = jnp.where(is_brow, c * dv, us)           # (x, y)

    # y-neighbours via XLU rolls; the wrapped column is fixed up with the
    # ghost-column value (reflect for nv==0, Neumann u + 2*h*nv/k otherwise).
    left_n = pltpu.roll(vs, 1, axis=1)            # value at column j-1 (wraps at j=0)
    right_n = pltpu.roll(vs, y - 1, axis=1)       # value at column j+1 (wraps at j=y-1)
    if nv_is_zero:
        # reflect pad: ghost_left = v[:, 1], ghost_right = v[:, y-2]
        vs_l = jnp.where(col == 0, right_n, left_n)
        vs_r = jnp.where(col == y - 1, left_n, right_n)
    else:
        # Neumann ghost uses the raw u values on ALL rows (incl. cap rows).
        ug = us + c * ghost
        vs_l = jnp.where(col == 0, ug, left_n)
        vs_r = jnp.where(col == y - 1, ug, right_n)

    # 3x3 stencil: combine the three columns per weight row, then roll rows.
    conv = None
    for di in (-1, 0, 1):
        w_l, w_c, w_r = (float(w) for w in weight[di + 1])
        acc = None
        for w, arr in ((w_l, vs_l), (w_c, vs), (w_r, vs_r)):
            if w != 0.0:
                term = w * arr
                acc = term if acc is None else acc + term
        if acc is None:
            continue
        if di == -1:
            acc = pltpu.roll(acc, 1, axis=0)      # value from row i-1
        elif di == 1:
            acc = pltpu.roll(acc, x - 1, axis=0)  # value from row i+1
        conv = acc if conv is None else conv + acc
    if conv is None:
        conv = jnp.zeros((x, y), jnp.float32)
    # Rows 0 / x-1 of `conv` carry wrapped garbage; they are masked out below.

    # Interior rows: stencil (broadcast over channels) + scaled source.
    # Boundary rows: Dirichlet value dv. One aligned full-tile store.
    out = jnp.where(is_brow, dv, conv[None] + cof * f)
    o_ref[...] = out.astype(o_ref.dtype)


def xneuy_dir_rhs_rec(u, f, *, k, h, dv, nv, weight=DEFAULT_WEIGHT):
    """JAX/Pallas equivalent of XNeuYDir_RHS_Rec.forward(u, f)."""
    assert u.ndim == 4 and u.shape == f.shape
    b, c, x, y = u.shape
    cof = -(h ** 2) / (k * 4.0)
    ghost = 2.0 * h * nv / k

    # VMEM sizing: u, f, out blocks, double-buffered by the pipeline.
    itemsize = jnp.dtype(u.dtype).itemsize
    block_bytes = 3 * 2 * c * x * y * itemsize
    vmem_limit = None
    if block_bytes > (12 << 20):   # would crowd v5e's 16 MiB default scoped VMEM
        # TODO(synk): for fields too large to hold a full (c, x, y) image in
        # VMEM (v7x: 64 MiB physical), add x-tiling with a 1-row halo (manual
        # DMA) instead of just raising the limit.
        vmem_limit = int(min(block_bytes + (4 << 20), 60 << 20))
    # TODO(synk): for tiny production fields (y << 128), pack several batch
    # images per grid step / into the lane axis to amortize per-step overhead.

    kern = functools.partial(
        _stencil_kernel,
        weight=tuple(tuple(float(w) for w in r) for r in weight),
        cof=float(cof), dv=float(dv), ghost=float(ghost),
        nv_is_zero=(nv == 0))

    return pl.pallas_call(
        kern,
        out_shape=jax.ShapeDtypeStruct((b, c, x, y), u.dtype),
        grid=(b,),
        in_specs=[
            pl.BlockSpec((None, c, x, y), lambda i: (i, 0, 0, 0)),
            pl.BlockSpec((None, c, x, y), lambda i: (i, 0, 0, 0)),
        ],
        out_specs=pl.BlockSpec((None, c, x, y), lambda i: (i, 0, 0, 0)),
        compiler_params=pltpu.CompilerParams(
            dimension_semantics=("parallel",),
            vmem_limit_bytes=vmem_limit),
    )(u, f)


def _reference(u, f, *, k, h, dv, nv, weight=DEFAULT_WEIGHT):
    """Independent pure-JAX translation of the torch forward (pad + lax.conv)."""
    b, c, x, y = u.shape
    dt = u.dtype
    if nv == 0:
        v = u[:, :, 1:-1, :]
        v = jnp.pad(v, ((0, 0), (0, 0), (1, 1), (0, 0)),
                    mode="constant", constant_values=dv)
        v = jnp.pad(v, ((0, 0), (0, 0), (0, 0), (1, 1)), mode="reflect")
    else:
        ghost = 2.0 * h * nv / k
        cap = jnp.full((b, c, 1, y), dv, dtype=dt)
        core = jnp.concatenate([cap, u[:, :, 1:-1, :], cap], axis=2)
        v = jnp.concatenate(
            [u[:, :, :, 0:1] + ghost, core, u[:, :, :, -1:] + ghost], axis=3)
    w = jnp.broadcast_to(jnp.asarray(weight, dt)[None, None], (1, c, 3, 3))
    conv = lax.conv_general_dilated(
        v, w, window_strides=(1, 1), padding="VALID",
        dimension_numbers=("NCHW", "OIHW", "NCHW"),
        precision=lax.Precision.HIGHEST)                      # (b, 1, x-2, y)
    cof = -(h ** 2) / (k * 4.0)
    interior = conv + cof * f[:, :, 1:-1, :]                  # broadcast over c
    return jnp.concatenate(
        [v[:, :, 0:1, 1:-1], interior, v[:, :, -1:, 1:-1]], axis=2)


if __name__ == "__main__":
    key = jax.random.PRNGKey(0)
    ku, kf = jax.random.split(key)

    # Lane-dense demo shapes (y = 128 lanes, x = 16 sublanes). Cases exercise
    # both boundary branches, multi-channel input and a general 3x3 weight.
    asym_w = ((0.05, 0.10, 0.15),
              (0.20, 0.00, 0.25),
              (0.10, 0.05, 0.10))
    cases = [
        ((2, 1, 16, 128), 0.0, DEFAULT_WEIGHT),
        ((2, 1, 16, 128), 1.0, DEFAULT_WEIGHT),
        ((2, 3, 16, 128), 2.0, asym_w),
    ]
    params = dict(k=1.0, h=0.1, dv=0.5)

    ok = True
    for shape, nv, weight in cases:
        u = jax.random.normal(ku, shape, dtype=jnp.float32)
        f = jax.random.normal(kf, shape, dtype=jnp.float32)
        out = jax.block_until_ready(
            xneuy_dir_rhs_rec(u, f, nv=nv, weight=weight, **params))
        ref = jax.block_until_ready(
            _reference(u, f, nv=nv, weight=weight, **params))
        ok &= (out.shape == shape)
        ok &= bool(np.allclose(np.asarray(out), np.asarray(ref),
                               atol=1e-5, rtol=1e-5))
    if ok:
        print("KERNEL_OK")
    else:
        print("KERNEL_MISMATCH")
</pallas_src>

<mosaic_0001>
module attributes {stable_mosaic.version = 11 : i64} {
  func.func @_stencil_kernel(%arg0: i32, %arg1: memref<1x1x16x128xf32, #tpu.memory_space<vmem>>, %arg2: memref<1x1x16x128xf32, #tpu.memory_space<vmem>>, %arg3: memref<1x1x16x128xf32, #tpu.memory_space<vmem>>) attributes {dimension_semantics = [#tpu.dimension_semantics<parallel>], iteration_bounds = array<i64: 2>, scalar_prefetch = 0 : i64, scratch_operands = 0 : i64, tpu.core_type = #tpu.core_type<tc>, window_params = [{transform_indices = @transform_0, window_bounds = array<i64: 1, 1, 16, 128>}, {transform_indices = @transform_1, window_bounds = array<i64: 1, 1, 16, 128>}, {transform_indices = @transform_2, window_bounds = array<i64: 1, 1, 16, 128>}]} {
    %c0 = arith.constant 0 : index
    %c0_0 = arith.constant 0 : index
    %c0_1 = arith.constant 0 : index
    %c0_2 = arith.constant 0 : index
    %0 = vector.load %arg1[%c0, %c0_0, %c0_1, %c0_2] : memref<1x1x16x128xf32, #tpu.memory_space<vmem>>, vector<1x1x16x128xf32>
    %1 = vector.shape_cast %0 : vector<1x1x16x128xf32> to vector<1x16x128xf32>
    %c0_3 = arith.constant 0 : index
    %c0_4 = arith.constant 0 : index
    %c0_5 = arith.constant 0 : index
    %c0_6 = arith.constant 0 : index
    %2 = vector.load %arg2[%c0_3, %c0_4, %c0_5, %c0_6] : memref<1x1x16x128xf32, #tpu.memory_space<vmem>>, vector<1x1x16x128xf32>
    %3 = vector.shape_cast %2 : vector<1x1x16x128xf32> to vector<1x16x128xf32>
    %4 = vector.shape_cast %1 : vector<1x16x128xf32> to vector<16x128xf32>
    %5 = tpu.iota {dimensions = array<i32: 0>} : vector<16x128xi32>
    %6 = tpu.iota {dimensions = array<i32: 1>} : vector<16x128xi32>
    %c0_i32 = arith.constant 0 : i32
    %7 = vector.broadcast %c0_i32 : i32 to vector<16x128xi32>
    %8 = arith.cmpi eq, %5, %7 : vector<16x128xi32>
    %c15_i32 = arith.constant 15 : i32
    %9 = vector.broadcast %c15_i32 : i32 to vector<16x128xi32>
    %10 = arith.cmpi eq, %5, %9 : vector<16x128xi32>
    %11 = arith.ori %8, %10 : vector<16x128xi1>
    %cst = arith.constant 5.000000e-01 : f32
    %12 = vector.broadcast %cst : f32 to vector<16x128xf32>
    %13 = arith.select %11, %12, %4 : vector<16x128xi1>, vector<16x128xf32>
    %c1_i32 = arith.constant 1 : i32
    %14 = tpu.dynamic_rotate %13 by %c1_i32 dim 1 : vector<16x128xf32>, i32 -> vector<16x128xf32>
    %c127_i32 = arith.constant 127 : i32
    %15 = tpu.dynamic_rotate %13 by %c127_i32 dim 1 : vector<16x128xf32>, i32 -> vector<16x128xf32>
    %c0_i32_7 = arith.constant 0 : i32
    %16 = vector.broadcast %c0_i32_7 : i32 to vector<16x128xi32>
    %17 = arith.cmpi eq, %6, %16 : vector<16x128xi32>
    %18 = arith.select %17, %15, %14 : vector<16x128xi1>, vector<16x128xf32>
    %c127_i32_8 = arith.constant 127 : i32
    %19 = vector.broadcast %c127_i32_8 : i32 to vector<16x128xi32>
    %20 = arith.cmpi eq, %6, %19 : vector<16x128xi32>
    %21 = arith.select %20, %14, %15 : vector<16x128xi1>, vector<16x128xf32>
    %cst_9 = arith.constant 2.500000e-01 : f32
    %22 = vector.broadcast %cst_9 : f32 to vector<16x128xf32>
    %23 = arith.mulf %22, %13 : vector<16x128xf32>
    %c1_i32_10 = arith.constant 1 : i32
    %24 = tpu.dynamic_rotate %23 by %c1_i32_10 dim 0 : vector<16x128xf32>, i32 -> vector<16x128xf32>
    %cst_11 = arith.constant 2.500000e-01 : f32
    %25 = vector.broadcast %cst_11 : f32 to vector<16x128xf32>
    %26 = arith.mulf %25, %18 : vector<16x128xf32>
    %cst_12 = arith.constant 2.500000e-01 : f32
    %27 = vector.broadcast %cst_12 : f32 to vector<16x128xf32>
    %28 = arith.mulf %27, %21 : vector<16x128xf32>
    %29 = arith.addf %26, %28 : vector<16x128xf32>
    %30 = arith.addf %24, %29 : vector<16x128xf32>
    %cst_13 = arith.constant 2.500000e-01 : f32
    %31 = vector.broadcast %cst_13 : f32 to vector<16x128xf32>
    %32 = arith.mulf %31, %13 : vector<16x128xf32>
    %c15_i32_14 = arith.constant 15 : i32
    %33 = tpu.dynamic_rotate %32 by %c15_i32_14 dim 0 : vector<16x128xf32>, i32 -> vector<16x128xf32>
    %34 = arith.addf %30, %33 : vector<16x128xf32>
    %35 = vector.shape_cast %34 : vector<16x128xf32> to vector<1x16x128xf32>
    %cst_15 = arith.constant -2.500000e-03 : f32
    %36 = vector.broadcast %cst_15 : f32 to vector<1x16x128xf32>
    %37 = arith.mulf %36, %3 : vector<1x16x128xf32>
    %38 = arith.addf %35, %37 : vector<1x16x128xf32>
    %cst_16 = arith.constant 5.000000e-01 : f32
    %39 = vector.shape_cast %11 : vector<16x128xi1> to vector<1x16x128xi1>
    %40 = vector.broadcast %cst_16 : f32 to vector<1x16x128xf32>
    %41 = arith.select %39, %40, %38 : vector<1x16x128xi1>, vector<1x16x128xf32>
    %c0_17 = arith.constant 0 : index
    %c0_18 = arith.constant 0 : index
    %c0_19 = arith.constant 0 : index
    %c0_20 = arith.constant 0 : index
    %42 = vector.load %arg3[%c0_17, %c0_18, %c0_19, %c0_20] : memref<1x1x16x128xf32, #tpu.memory_space<vmem>>, vector<1x1x16x128xf32>
    %43 = vector.shape_cast %42 : vector<1x1x16x128xf32> to vector<1x16x128xf32>
    %44 = vector.shape_cast %41 : vector<1x16x128xf32> to vector<1x1x16x128xf32>
    tpu.vector_store %arg3[%c0_17, %c0_18, %c0_19, %c0_20], %44 {strides = array<i32>} : memref<1x1x16x128xf32, #tpu.memory_space<vmem>>, vector<1x1x16x128xf32>,
    return
  }
  func.func @transform_0(%arg0: i32) -> (i32, i32, i32, i32) {
    %c0_i32 = arith.constant 0 : i32
    %c0_i32_0 = arith.constant 0 : i32
    %c0_i32_1 = arith.constant 0 : i32
    %c0_i32_2 = arith.constant 0 : i32
    return %arg0, %c0_i32, %c0_i32_0, %c0_i32_1 : i32, i32, i32, i32
  }
  func.func @transform_1(%arg0: i32) -> (i32, i32, i32, i32) {
    %c0_i32 = arith.constant 0 : i32
    %c0_i32_0 = arith.constant 0 : i32
    %c0_i32_1 = arith.constant 0 : i32
    %c0_i32_2 = arith.constant 0 : i32
    return %arg0, %c0_i32, %c0_i32_0, %c0_i32_1 : i32, i32, i32, i32
  }
  func.func @transform_2(%arg0: i32) -> (i32, i32, i32, i32) {
    %c0_i32 = arith.constant 0 : i32
    %c0_i32_0 = arith.constant 0 : i32
    %c0_i32_1 = arith.constant 0 : i32
    %c0_i32_2 = arith.constant 0 : i32
    return %arg0, %c0_i32, %c0_i32_0, %c0_i32_1 : i32, i32, i32, i32
  }
}

</mosaic_0001>

<llo_original>
// kernel: tpu_custom_call.1
$region0: #{tpu_custom_call.1}
  #allocation0 [shape = 'u32[]', space=smem, size = 0x4, offset = 0x4, fixed_abs, tag = 'smem constant byte address 0x4 - core index']
  #allocation1 [shape = 'u32[72,128]{1,0:T(1,128)}', space=vmem, size = 0x9000, scoped, tag = 'internal scratch']
  %s0 = inlined_call_operand.hbm [shape: f32[2,1,16,128], index: 0, kind: input, shape index: {}]
  %s1 = inlined_call_operand.hbm [shape: f32[2,1,16,128], index: 1, kind: input, shape index: {}]
  %s2 = inlined_call_operand.hbm [shape: f32[2,1,16,128], index: 2, kind: output, shape index: {}]
  %s3 = sld [smem:[#allocation0]]
  $region49: #{tpu_custom_call.1} parent=0
    _
  %s5 = ssub.s32 1, %s3
  %s6 = scalar_select 0, %s5, %s3
  $region1: #{tpu_custom_call.1} parent=0
    #allocation2 [shape = 'u8[16384]{0}', space=vmem, size = 0x4000, scoped, tag = 'input window, operand 0']
    #allocation3 [shape = 's32[2]{0}', space=sflag, size = 0x8, scoped, tag = 'scoped memory for tpu_custom_call.1']
    #allocation4 [shape = 's32[2]{0}', space=sflag, size = 0x8, scoped, tag = 'scoped memory for tpu_custom_call.1']
    #allocation5 [shape = 'u8[16384]{0}', space=vmem, size = 0x4000, scoped, tag = 'input window, operand 1']
    #allocation6 [shape = 's32[2]{0}', space=sflag, size = 0x8, scoped, tag = 'scoped memory for tpu_custom_call.1']
    #allocation7 [shape = 'u8[16384]{0}', space=vmem, size = 0x4000, scoped, tag = 'output window, operand 0']
    %7 = vsyncpa [#allocation3], 0
    %s8 = scalar_lea.sflag [#allocation3], 1
    %9 = vsyncpa %s8, 0
    %10 = vsyncpa [#allocation6], 0
    %s11 = scalar_lea.sflag [#allocation6], 1
    %12 = vsyncpa %s11, 0
    %13 = vsyncpa [#allocation4], 0
    %s14 = scalar_lea.sflag [#allocation4], 1
    %15 = vsyncpa %s14, 0
    loop: start=0, step=1, limit=4
    $region2: #{tpu_custom_call.1} parent=1 // loop_pre_header
      _
    $region3: #{tpu_custom_call.1} parent=1 // loop_header
      %s17 = sphi 0, %s21
      %p18 = scmp.ge.s32.totalorder %s17, 4
      %s27 = sphi 0, %s29
      %s30 = sphi 0, %s27
      %s31 = sphi 0, %s30
      %s47 = sphi 0, %s31
      %s53 = sphi 0, %s55
      %s56 = sphi 0, %s53
      %s57 = sphi 0, %s56
      %s73 = sphi 0, %s57
      %s79 = sphi 0, %s81
      %s82 = sphi 0, %s79
      %s83 = sphi 0, %s82
      %s99 = sphi 0, %s83
    $region4: #{tpu_custom_call.1} parent=1 // loop_header_branch
      %20 = sbr.rel (%p18) target = $region8
    $region5: #{tpu_custom_call.1} parent=1 // loop_body
      %s22 = ssub.s32 %s17, 1
      %s23 = ssub.s32 %s17, 2
      %s24 = sadd.s32 %s17, 1
      %s25 = ssub.s32 %s17, %s24
      %p26 = scmp.eq.s32.totalorder %s25, 0
      %s28 = sadd.s32 %s27, 1
      %s29 = scalar_select %p26, %s27, %s28
      %p32 = pneg %p26
      %p33 = scmp.eq.s32.totalorder %s17, 1
      %p34 = por %p32, %p33
      %p35 = scmp.ne.s32.totalorder %s27, %s30
      %p36 = scmp.eq.s32.totalorder %s17, 0
      %p37 = por %p35, %p36
      %p38 = scmp.ne.s32.totalorder %s27, %s30
      %p39 = scmp.eq.s32.totalorder %s22, 1
      %p40 = por %p38, %p39
      %p41 = scmp.ne.s32.totalorder %s30, %s31
      %p42 = scmp.eq.s32.totalorder %s22, 0
      %p43 = por %p41, %p42
      %p44 = scmp.ne.s32.totalorder %s30, %s31
      %p45 = scmp.eq.s32.totalorder %s23, 1
      %p46 = por %p44, %p45
      %p48 = scmp.ne.s32.totalorder %s31, %s47
      %p49 = scmp.eq.s32.totalorder %s23, 0
      %p50 = por %p48, %p49
      %s51 = ssub.s32 %s17, %s24
      %p52 = scmp.eq.s32.totalorder %s51, 0
      %s54 = sadd.s32 %s53, 1
      %s55 = scalar_select %p52, %s53, %s54
      %p58 = pneg %p52
      %p59 = scmp.eq.s32.totalorder %s17, 1
      %p60 = por %p58, %p59
      %p61 = scmp.ne.s32.totalorder %s53, %s56
      %p62 = scmp.eq.s32.totalorder %s17, 0
      %p63 = por %p61, %p62
      %p64 = scmp.ne.s32.totalorder %s53, %s56
      %p65 = scmp.eq.s32.totalorder %s22, 1
      %p66 = por %p64, %p65
      %p67 = scmp.ne.s32.totalorder %s56, %s57
      %p68 = scmp.eq.s32.totalorder %s22, 0
      %p69 = por %p67, %p68
      %p70 = scmp.ne.s32.totalorder %s56, %s57
      %p71 = scmp.eq.s32.totalorder %s23, 1
      %p72 = por %p70, %p71
      %p74 = scmp.ne.s32.totalorder %s57, %s73
      %p75 = scmp.eq.s32.totalorder %s23, 0
      %p76 = por %p74, %p75
      %s77 = ssub.s32 %s17, %s24
      %p78 = scmp.eq.s32.totalorder %s77, 0
      %s80 = sadd.s32 %s79, 1
      %s81 = scalar_select %p78, %s79, %s80
      %p84 = pneg %p78
      %p85 = scmp.eq.s32.totalorder %s17, 1
      %p86 = por %p84, %p85
      %p87 = scmp.ne.s32.totalorder %s79, %s82
      %p88 = scmp.eq.s32.totalorder %s17, 0
      %p89 = por %p87, %p88
      %p90 = scmp.ne.s32.totalorder %s79, %s82
      %p91 = scmp.eq.s32.totalorder %s22, 1
      %p92 = por %p90, %p91
      %p93 = scmp.ne.s32.totalorder %s82, %s83
      %p94 = scmp.eq.s32.totalorder %s22, 0
      %p95 = por %p93, %p94
      %p96 = scmp.ne.s32.totalorder %s82, %s83
      %p97 = scmp.eq.s32.totalorder %s23, 1
      %p98 = por %p96, %p97
      %p100 = scmp.ne.s32.totalorder %s83, %s99
      %p101 = scmp.eq.s32.totalorder %s23, 0
      %p102 = por %p100, %p101
      %p103 = scmp.le.s32.totalorder 1, %s17
      %p104 = scmp.lt.s32.totalorder %s17, 3
      %p105 = pnand %p103, %p104
      %p106 = pneg %p105
      // Predicated region
      $region9: #{tpu_custom_call.1} parent=5 // pred_check
        _
      $region10: #{tpu_custom_call.1} parent=5 // pred_check_branch
        %108 = sbr.rel (%p105) target = $region12
      $region11: #{tpu_custom_call.1} parent=5 // pred_region
        %s109 = ssub.s32 %s17, 1
      $region12: #{tpu_custom_call.1} parent=5 // pred_fallthru
        _
      %p110 = scmp.lt.s32.totalorder %s17, 2
      // Predicated region
      $region13: #{tpu_custom_call.1} parent=5 // pred_check
        %p111 = pneg %p110
      $region14: #{tpu_custom_call.1} parent=5 // pred_check_branch
        %113 = sbr.rel (%p111) target = $region16
      $region15: #{tpu_custom_call.1} parent=5 // pred_region
        // Predicated region
        $region17: #{tpu_custom_call.1} parent=15 // pred_check
          %p114 = pneg %p37
        $region18: #{tpu_custom_call.1} parent=15 // pred_check_branch
          %116 = sbr.rel (%p114) target = $region20
        $region19: #{tpu_custom_call.1} parent=15 // pred_region
          %s117 = sand.u32 %s27, 1
          %s118 = scalar_lea.sflag [#allocation3], %s117
          %s119 = sand.u32 %s27, 1
          %s120 = smul.addr %s119, 16
          %s121 = scalar_lea.vmem [#allocation2], %s120
          %123 = vsyncadd %s118, 0
          %s124 = smul.addr %s17, 2
          %s125 = smul.addr %s124, 8
          %s126 = scalar_lea.hbm %s0, %s125
          %s127 = sshll.u32 %s126, 4
          %s128 = int_to_ptr.hbm [resolvable:$true] %s127
          %s129 = sshll.u32 %s121, 4
          %s130 = int_to_ptr.vmem [resolvable:$true] %s129
          %135 = dma.hbm_to_vmem [thread:$0]  %s128, 256, %s130, %s118, 128, 128, 8
        $region20: #{tpu_custom_call.1} parent=15 // pred_fallthru
          _
        // Predicated region
        $region21: #{tpu_custom_call.1} parent=15 // pred_check
          %p136 = pneg %p63
        $region22: #{tpu_custom_call.1} parent=15 // pred_check_branch
          %138 = sbr.rel (%p136) target = $region24
        $region23: #{tpu_custom_call.1} parent=15 // pred_region
          %s139 = sand.u32 %s53, 1
          %s140 = scalar_lea.sflag [#allocation6], %s139
          %s141 = sand.u32 %s53, 1
          %s142 = smul.addr %s141, 16
          %s143 = scalar_lea.vmem [#allocation5], %s142
          %145 = vsyncadd %s140, 0
          %s146 = smul.addr %s17, 2
          %s147 = smul.addr %s146, 8
          %s148 = scalar_lea.hbm %s1, %s147
          %s149 = sshll.u32 %s148, 4
          %s150 = int_to_ptr.hbm [resolvable:$true] %s149
          %s151 = sshll.u32 %s143, 4
          %s152 = int_to_ptr.vmem [resolvable:$true] %s151
          %157 = dma.hbm_to_vmem [thread:$0]  %s150, 256, %s152, %s140, 128, 128, 8
        $region24: #{tpu_custom_call.1} parent=15 // pred_fallthru
          _
      $region16: #{tpu_custom_call.1} parent=5 // pred_fallthru
        _
      %p158 = scmp.le.s32.totalorder 1, %s17
      %p159 = scmp.lt.s32.totalorder %s17, 3
      %p160 = pnand %p158, %p159
      %p161 = pneg %p160
      // Predicated region
      $region25: #{tpu_custom_call.1} parent=5 // pred_check
        _
      $region26: #{tpu_custom_call.1} parent=5 // pred_check_branch
        %163 = sbr.rel (%p160) target = $region28
      $region27: #{tpu_custom_call.1} parent=5 // pred_region
        %s164 = ssub.s32 %s17, 1
        %s165 = sand.u32 %s30, 1
        %s166 = scalar_lea.sflag [#allocation3], %s165
        %s167 = sand.u32 %s30, 1
        %s168 = smul.addr %s167, 16
        %s169 = scalar_lea.vmem [#allocation2], %s168
        // Predicated region
        $region29: #{tpu_custom_call.1} parent=27 // pred_check
          %p170 = pneg %p43
        $region30: #{tpu_custom_call.1} parent=27 // pred_check_branch
          %172 = sbr.rel (%p170) target = $region32
        $region31: #{tpu_custom_call.1} parent=27 // pred_region
          %174 = dma.done %s166, 256
        $region32: #{tpu_custom_call.1} parent=27 // pred_fallthru
          _
        %s175 = sand.u32 %s56, 1
        %s176 = scalar_lea.sflag [#allocation6], %s175
        %s177 = sand.u32 %s56, 1
        %s178 = smul.addr %s177, 16
        %s179 = scalar_lea.vmem [#allocation5], %s178
        // Predicated region
        $region33: #{tpu_custom_call.1} parent=27 // pred_check
          %p180 = pneg %p69
        $region34: #{tpu_custom_call.1} parent=27 // pred_check_branch
          %182 = sbr.rel (%p180) target = $region36
        $region35: #{tpu_custom_call.1} parent=27 // pred_region
          %184 = dma.done %s176, 256
        $region36: #{tpu_custom_call.1} parent=27 // pred_fallthru
          _
        %s185 = sand.u32 %s30, 1
        %s186 = scalar_lea.sflag [#allocation3], %s185
        %s187 = sand.u32 %s30, 1
        %s188 = smul.addr %s187, 16
        %s189 = scalar_lea.vmem [#allocation2], %s188
        %p190 = pneg %p43
        %p191 = pneg %p40
        %s192 = sand.u32 %s56, 1
        %s193 = scalar_lea.sflag [#allocation6], %s192
        %s194 = sand.u32 %s56, 1
        %s195 = smul.addr %s194, 16
        %s196 = scalar_lea.vmem [#allocation5], %s195
        %p197 = pneg %p69
        %p198 = pneg %p66
        %p199 = pneg %p95
        %p200 = pneg %p92
        %s201 = sand.u32 %s82, 1
        %s202 = scalar_lea.sflag [#allocation4], %s201
        %s203 = sand.u32 %s82, 1
        %s204 = smul.addr %s203, 16
        %s205 = scalar_lea.vmem [#allocation7], %s204
        %v206 = vld [vmem:[%s169] sm:$0xff]
        %v207 = vld [vmem:[%s169 + $0x8] sm:$0xff]
        %v208 = vld [vmem:[%s179] sm:$0xff]
        %v209 = vld [vmem:[%s179 + $0x8] sm:$0xff]
        %v210 = vlaneseq
        %v211 = vshrl.u32 %v210, 7
        %v212 = vadd.s32 %v211, 8
        %v213 = vlaneseq
        %v214 = vand.u32 %v213, 127
        %vm215 = vcmp.eq.s32.totalorder %v211, 0
        %vm216 = vcmp.eq.s32.totalorder %v212, 0
        %vm217 = vcmp.eq.s32.totalorder %v211, 15
        %vm218 = vcmp.eq.s32.totalorder %v212, 15
        %vm219 = vmor %vm215, %vm217
        %vm220 = vmor %vm216, %vm218
        %v221 = vsel %vm219, 0.5, %v206
        %v222 = vsel %vm220, 0.5, %v207
        %223 = vrot.lane.b32.xlu0 %v221, 1
        %v224 = vpop.permute.xlu0 %223
        %225 = vrot.lane.b32.xlu0 %v222, 1
        %v226 = vpop.permute.xlu0 %225
        %227 = vrot.lane.b32.xlu0 %v221, 127
        %v228 = vpop.permute.xlu0 %227
        %229 = vrot.lane.b32.xlu0 %v222, 127
        %v230 = vpop.permute.xlu0 %229
        %vm231 = vcmp.eq.s32.totalorder %v214, 0
        %v232 = vsel %vm231, %v228, %v224
        %v233 = vsel %vm231, %v230, %v226
        %vm234 = vcmp.eq.s32.totalorder %v214, 127
        %v235 = vsel %vm234, %v224, %v228
        %v236 = vsel %vm234, %v226, %v230
        %v237 = vmul.f32 %v221, 0.25
        %v238 = vmul.f32 %v222, 0.25
        %v239 = vrot.slane %v237, 7
        %v240 = vrot.slane %v238, 7
        %vm241 = vcmp.lt.s32.totalorder %v211, 1
        %v242 = vsel %vm241, %v239, %v240
        %v243 = vsel %vm241, %v240, %v239
        %v244 = vmul.f32 %v232, 0.25
        %v245 = vmul.f32 %v233, 0.25
        %v246 = vmul.f32 %v235, 0.25
        %v247 = vmul.f32 %v236, 0.25
        %v248 = vadd.f32 %v244, %v246
        %v249 = vadd.f32 %v245, %v247
        %v250 = vadd.f32 %v243, %v248
        %v251 = vadd.f32 %v242, %v249
        %v252 = vrot.slane %v237, 1
        %v253 = vrot.slane %v238, 1
        %vm254 = vcmp.lt.s32.totalorder %v211, 7
        %v255 = vsel %vm254, %v252, %v253
        %v256 = vsel %vm254, %v253, %v252
        %v257 = vadd.f32 %v250, %v255
        %v258 = vadd.f32 %v251, %v256
        %v259 = vmul.f32 %v208, -0.0025
        %v260 = vmul.f32 %v209, -0.0025
        %v261 = vadd.f32 %v257, %v259
        %v262 = vadd.f32 %v258, %v260
        %v263 = vsel %vm219, 0.5, %v261
        %v264 = vsel %vm220, 0.5, %v262
        %265 = vst [vmem:[%s205] sm:$0xff] %v263
        %266 = vst [vmem:[%s205 + $0x8] sm:$0xff] %v264
        %s267 = sand.u32 %s82, 1
        %s268 = scalar_lea.sflag [#allocation4], %s267
        %s269 = sand.u32 %s82, 1
        %s270 = smul.addr %s269, 16
        %s271 = scalar_lea.vmem [#allocation7], %s270
        // Predicated region
        $region37: #{tpu_custom_call.1} parent=27 // pred_check
          %p272 = pneg %p92
        $region38: #{tpu_custom_call.1} parent=27 // pred_check_branch
          %274 = sbr.rel (%p272) target = $region40
        $region39: #{tpu_custom_call.1} parent=27 // pred_region
          %276 = vsyncadd %s268, 0
          %s277 = smul.addr %s22, 2
          %s278 = smul.addr %s277, 8
          %s279 = scalar_lea.hbm %s2, %s278
          %s280 = sshll.u32 %s271, 4
          %s281 = int_to_ptr.vmem [resolvable:$true] %s280
          %s282 = sshll.u32 %s279, 4
          %s283 = int_to_ptr.hbm [resolvable:$true] %s282
          %288 = dma.vmem_to_hbm [thread:$0]  %s281, 256, %s283, %s268, 128, 128, 8
        $region40: #{tpu_custom_call.1} parent=27 // pred_fallthru
          _
      $region28: #{tpu_custom_call.1} parent=5 // pred_fallthru
        _
      %p289 = scmp.le.s32.totalorder 2, %s17
      // Predicated region
      $region41: #{tpu_custom_call.1} parent=5 // pred_check
        %p290 = pneg %p289
      $region42: #{tpu_custom_call.1} parent=5 // pred_check_branch
        %292 = sbr.rel (%p290) target = $region44
      $region43: #{tpu_custom_call.1} parent=5 // pred_region
        %s293 = ssub.s32 %s17, 2
        // Predicated region
        $region45: #{tpu_custom_call.1} parent=43 // pred_check
          %p294 = pneg %p98
        $region46: #{tpu_custom_call.1} parent=43 // pred_check_branch
          %296 = sbr.rel (%p294) target = $region48
        $region47: #{tpu_custom_call.1} parent=43 // pred_region
          %s297 = sand.u32 %s83, 1
          %s298 = scalar_lea.sflag [#allocation4], %s297
          %s299 = sand.u32 %s83, 1
          %s300 = smul.addr %s299, 16
          %s301 = scalar_lea.vmem [#allocation7], %s300
          %303 = dma.done %s298, 256
        $region48: #{tpu_custom_call.1} parent=43 // pred_fallthru
          _
      $region44: #{tpu_custom_call.1} parent=5 // pred_fallthru
        _
    $region6: #{tpu_custom_call.1} parent=1 // loop_footer
      %s21 = sadd.s32 1, %s17
    $region7: #{tpu_custom_call.1} parent=1 // loop_footer_branch
      %16 = sbr.rel target = $region3
    $region8: #{tpu_custom_call.1} parent=1 // loop_exit
      _
    %304 = vsyncpa [#allocation3], 1
    %s305 = scalar_lea.sflag [#allocation3], 1
    %306 = vsyncpa %s305, 1
    %307 = vsyncpa [#allocation6], 1
    %s308 = scalar_lea.sflag [#allocation6], 1
    %309 = vsyncpa %s308, 1
    %310 = vsyncpa [#allocation4], 1
    %s311 = scalar_lea.sflag [#allocation4], 1
    %312 = vsyncpa %s311, 1

</llo_original>
